<compile_context>
chip_gen: v6e
topology: v6e:2x2x1
jax: 0.10.0
libtpu: 0.0.40
codegen_flags: <defaults>
</compile_context>

<pallas_src>
import functools

import jax
import jax.numpy as jnp
from jax.experimental import pallas as pl
from jax.experimental.pallas import tpu as pltpu


def _round_up(n, m):
    return ((n + m - 1) // m) * m


def _disc_kernel(x_ref, w1_ref, b1_ref, w2_ref, b2_ref, w3_ref, b3_ref, o_ref):
    # x_ref : (TB, D) f32   -- one batch tile, streamed straight from HBM
    # w1_ref: (D, 64) bf16  -- VMEM-resident (constant index map)
    # b1_ref: (1, 64) f32, w2_ref: (64, 16) f32, b2_ref: (1, 16) f32
    # w3_ref: (1, 16) f32,  b3_ref: (1, 1) f32
    # o_ref : (TB, 1) f32

    # bf16 cast on the VPU, hidden under the x-tile DMA.
    xb = x_ref[...].astype(jnp.bfloat16)

    # Layer 1: (TB, D) @ (D, 64) on the MXU, f32 accumulate.
    h1 = jnp.dot(xb, w1_ref[...], preferred_element_type=jnp.float32)
    h1 = jnp.maximum(h1 + b1_ref[...], 0.0)

    # Layer 2: (TB, 64) @ (64, 16), f32.
    h2 = jnp.dot(h1, w2_ref[...], preferred_element_type=jnp.float32)
    h2 = jnp.maximum(h2 + b2_ref[...], 0.0)

    # Layer 3: VPU multiply + lane reduce (XLU) instead of an N=1 MXU matmul.
    logits = jnp.sum(h2 * w3_ref[...], axis=1, keepdims=True) + b3_ref[...]

    # Sigmoid on the EUP.
    o_ref[...] = jax.nn.sigmoid(logits).astype(o_ref.dtype)


@functools.partial(jax.jit, static_argnames=("block_b",))
def discriminator_forward(x, params, *, block_b=1024):
    """x: (B, image_size*image_size) float32 -> (B, 1) float32 in (0, 1)."""
    w1, b1, w2, b2, w3, b3 = params          # torch layout: w (out, in), b (out,)
    B, d_in = x.shape
    h1_dim = w1.shape[0]                     # 64
    h2_dim = w2.shape[0]                     # 16

    # Batch tile: multiple of 8 sublanes, capped so the double-buffered f32
    # x tile stays within ~8 MiB of VMEM.
    vmem_budget = 8 * 1024 * 1024
    max_rows = max(8, (vmem_budget // (2 * 4 * d_in)) // 8 * 8)
    tb = max(8, min(block_b, _round_up(B, 8), max_rows))
    n_tiles = pl.cdiv(B, tb)

    # One-time, tiny layout transforms of the parameters (VMEM-resident).
    w1_t = w1.T.astype(jnp.bfloat16)         # (d_in, 64)
    b1_r = b1.reshape(1, h1_dim)             # (1, 64)
    w2_t = w2.T.astype(jnp.float32)          # (64, 16)
    b2_r = b2.reshape(1, h2_dim)             # (1, 16)
    w3_r = w3.reshape(1, h2_dim)             # (1, 16)
    b3_r = b3.reshape(1, 1)                  # (1, 1)

    return pl.pallas_call(
        _disc_kernel,
        out_shape=jax.ShapeDtypeStruct((B, 1), jnp.float32),
        grid=(n_tiles,),
        in_specs=[
            # Streaming batch tile (double-buffered by the Pallas pipeline).
            pl.BlockSpec((tb, d_in), lambda i: (i, 0)),
            # Weights / biases: constant index maps -> DMA'd once, VMEM-resident.
            pl.BlockSpec((d_in, h1_dim), lambda i: (0, 0)),
            pl.BlockSpec((1, h1_dim), lambda i: (0, 0)),
            pl.BlockSpec((h1_dim, h2_dim), lambda i: (0, 0)),
            pl.BlockSpec((1, h2_dim), lambda i: (0, 0)),
            pl.BlockSpec((1, h2_dim), lambda i: (0, 0)),
            pl.BlockSpec((1, 1), lambda i: (0, 0)),
        ],
        out_specs=pl.BlockSpec((tb, 1), lambda i: (i, 0)),
        compiler_params=pltpu.CompilerParams(
            dimension_semantics=("parallel",)),      # megacore sharding on v7x
    )(x, w1_t, b1_r, w2_t, b2_r, w3_r, b3_r)


def init_params(key, image_size):
    """torch.nn.Linear-style init: U(-1/sqrt(fan_in), 1/sqrt(fan_in)).
    Weights in torch (out_features, in_features) layout, biases (out_features,)."""
    d_in = image_size * image_size
    dims = [(d_in, 64), (64, 16), (16, 1)]
    params = []
    for fan_in, fan_out in dims:
        key, kw, kb = jax.random.split(key, 3)
        bound = 1.0 / (fan_in ** 0.5)
        w = jax.random.uniform(kw, (fan_out, fan_in), jnp.float32, -bound, bound)
        b = jax.random.uniform(kb, (fan_out,), jnp.float32, -bound, bound)
        params += [w, b]
    return tuple(params)


def reference_forward(x, params):
    w1, b1, w2, b2, w3, b3 = params
    hp = jax.lax.Precision.HIGHEST
    h1 = jnp.maximum(jnp.dot(x, w1.T, precision=hp) + b1, 0.0)
    h2 = jnp.maximum(jnp.dot(h1, w2.T, precision=hp) + b2, 0.0)
    return jax.nn.sigmoid(jnp.dot(h2, w3.T, precision=hp) + b3)


if __name__ == "__main__":
    key = jax.random.PRNGKey(0)
    # Case 1: small shapes consistent with the module (image_size=8 -> 64 feats).
    # Case 2: larger, ragged batch -> exercises boundary blocks / multi-tiling.
    for image_size, batch in [(8, 8), (16, 700)]:
        key, kx, kp = jax.random.split(key, 3)
        x = jax.random.normal(kx, (batch, image_size * image_size), jnp.float32)
        params = init_params(kp, image_size)

        out = jax.block_until_ready(discriminator_forward(x, params))
        ref = reference_forward(x, params)

        assert out.shape == (batch, 1)
        assert bool(jnp.all(jnp.isfinite(out)))
        err = float(jnp.max(jnp.abs(out - ref)))
        assert err < 5e-3, (
            f"mismatch vs reference (image_size={image_size}, batch={batch}): "
            f"max err {err}")

    print("KERNEL_OK")
</pallas_src>

<mosaic_0001>
module attributes {stable_mosaic.version = 11 : i64} {
  func.func @_disc_kernel(%arg0: i32, %arg1: memref<8x64xf32, #tpu.memory_space<vmem>>, %arg2: memref<64x64xbf16, #tpu.memory_space<vmem>>, %arg3: memref<1x64xf32, #tpu.memory_space<vmem>>, %arg4: memref<64x16xf32, #tpu.memory_space<vmem>>, %arg5: memref<1x16xf32, #tpu.memory_space<vmem>>, %arg6: memref<1x16xf32, #tpu.memory_space<vmem>>, %arg7: memref<1x1xf32, #tpu.memory_space<vmem>>, %arg8: memref<8x1xf32, #tpu.memory_space<vmem>>) attributes {dimension_semantics = [#tpu.dimension_semantics<parallel>], iteration_bounds = array<i64: 1>, scalar_prefetch = 0 : i64, scratch_operands = 0 : i64, tpu.core_type = #tpu.core_type<tc>, window_params = [{transform_indices = @transform_0, window_bounds = array<i64: 8, 64>}, {pipeline_mode = #tpu.pipeline_mode<synchronous>, transform_indices = @transform_1, window_bounds = array<i64: 64, 64>}, {pipeline_mode = #tpu.pipeline_mode<synchronous>, transform_indices = @transform_2, window_bounds = array<i64: 1, 64>}, {pipeline_mode = #tpu.pipeline_mode<synchronous>, transform_indices = @transform_3, window_bounds = array<i64: 64, 16>}, {pipeline_mode = #tpu.pipeline_mode<synchronous>, transform_indices = @transform_4, window_bounds = array<i64: 1, 16>}, {pipeline_mode = #tpu.pipeline_mode<synchronous>, transform_indices = @transform_5, window_bounds = array<i64: 1, 16>}, {pipeline_mode = #tpu.pipeline_mode<synchronous>, transform_indices = @transform_6, window_bounds = array<i64: 1, 1>}, {transform_indices = @transform_7, window_bounds = array<i64: 8, 1>}]} {
    %c0 = arith.constant 0 : index
    %c0_0 = arith.constant 0 : index
    %0 = vector.load %arg1[%c0, %c0_0] : memref<8x64xf32, #tpu.memory_space<vmem>>, vector<8x64xf32>
    %1 = arith.truncf %0 : vector<8x64xf32> to vector<8x64xbf16>
    %c0_1 = arith.constant 0 : index
    %c0_2 = arith.constant 0 : index
    %2 = vector.load %arg2[%c0_1, %c0_2] : memref<64x64xbf16, #tpu.memory_space<vmem>>, vector<64x64xbf16>
    %cst = arith.constant dense<0.000000e+00> : vector<8x64xf32>
    %3 = tpu.matmul %1, %2, %cst {dimension_numbers = #tpu.dot_dimension_numbers<[1], [0], [0], [1], [0, 0, 1, 1], [], []>} : vector<8x64xbf16>, vector<64x64xbf16>, vector<8x64xf32> -> vector<8x64xf32>
    %c0_3 = arith.constant 0 : index
    %c0_4 = arith.constant 0 : index
    %4 = vector.load %arg3[%c0_3, %c0_4] : memref<1x64xf32, #tpu.memory_space<vmem>>, vector<1x64xf32>
    %5 = vector.broadcast %4 : vector<1x64xf32> to vector<8x64xf32>
    %6 = arith.addf %3, %5 : vector<8x64xf32>
    %cst_5 = arith.constant 0.000000e+00 : f32
    %7 = vector.broadcast %cst_5 : f32 to vector<8x64xf32>
    %8 = arith.maximumf %6, %7 : vector<8x64xf32>
    %c0_6 = arith.constant 0 : index
    %c0_7 = arith.constant 0 : index
    %9 = vector.load %arg4[%c0_6, %c0_7] : memref<64x16xf32, #tpu.memory_space<vmem>>, vector<64x16xf32>
    %cst_8 = arith.constant dense<0.000000e+00> : vector<8x16xf32>
    %10 = tpu.matmul %8, %9, %cst_8 {dimension_numbers = #tpu.dot_dimension_numbers<[1], [0], [0], [1], [0, 0, 1, 1], [], []>} : vector<8x64xf32>, vector<64x16xf32>, vector<8x16xf32> -> vector<8x16xf32>
    %c0_9 = arith.constant 0 : index
    %c0_10 = arith.constant 0 : index
    %11 = vector.load %arg5[%c0_9, %c0_10] : memref<1x16xf32, #tpu.memory_space<vmem>>, vector<1x16xf32>
    %12 = vector.broadcast %11 : vector<1x16xf32> to vector<8x16xf32>
    %13 = arith.addf %10, %12 : vector<8x16xf32>
    %cst_11 = arith.constant 0.000000e+00 : f32
    %14 = vector.broadcast %cst_11 : f32 to vector<8x16xf32>
    %15 = arith.maximumf %13, %14 : vector<8x16xf32>
    %c0_12 = arith.constant 0 : index
    %c0_13 = arith.constant 0 : index
    %16 = vector.load %arg6[%c0_12, %c0_13] : memref<1x16xf32, #tpu.memory_space<vmem>>, vector<1x16xf32>
    %17 = vector.broadcast %16 : vector<1x16xf32> to vector<8x16xf32>
    %18 = arith.mulf %15, %17 : vector<8x16xf32>
    %cst_14 = arith.constant dense<0.000000e+00> : vector<8xf32>
    %19 = vector.multi_reduction <add>, %18, %cst_14 [1] : vector<8x16xf32> to vector<8xf32>
    %20 = vector.shape_cast %19 : vector<8xf32> to vector<8x1xf32>
    %c0_15 = arith.constant 0 : index
    %c0_16 = arith.constant 0 : index
    %21 = vector.load %arg7[%c0_15, %c0_16] : memref<1x1xf32, #tpu.memory_space<vmem>>, vector<1x1xf32>
    %22 = vector.broadcast %21 : vector<1x1xf32> to vector<8x1xf32>
    %23 = arith.addf %20, %22 : vector<8x1xf32>
    %24 = arith.negf %23 : vector<8x1xf32>
    %25 = math.exp %24 : vector<8x1xf32>
    %cst_17 = arith.constant 1.000000e+00 : f32
    %26 = vector.broadcast %cst_17 : f32 to vector<8x1xf32>
    %27 = arith.addf %26, %25 : vector<8x1xf32>
    %28 = arith.divf %26, %27 : vector<8x1xf32>
    %c0_18 = arith.constant 0 : index
    %c0_19 = arith.constant 0 : index
    %29 = vector.load %arg8[%c0_18, %c0_19] : memref<8x1xf32, #tpu.memory_space<vmem>>, vector<8x1xf32>
    tpu.vector_store %arg8[%c0_18, %c0_19], %28 {strides = array<i32>} : memref<8x1xf32, #tpu.memory_space<vmem>>, vector<8x1xf32>,
    return
  }
  func.func @transform_0(%arg0: i32) -> (i32, i32) {
    %c0_i32 = arith.constant 0 : i32
    %c0_i32_0 = arith.constant 0 : i32
    return %arg0, %c0_i32 : i32, i32
  }
  func.func @transform_1(%arg0: i32) -> (i32, i32) {
    %c0_i32 = arith.constant 0 : i32
    %c0_i32_0 = arith.constant 0 : i32
    %c0_i32_1 = arith.constant 0 : i32
    return %c0_i32, %c0_i32_0 : i32, i32
  }
  func.func @transform_2(%arg0: i32) -> (i32, i32) {
    %c0_i32 = arith.constant 0 : i32
    %c0_i32_0 = arith.constant 0 : i32
    %c0_i32_1 = arith.constant 0 : i32
    return %c0_i32, %c0_i32_0 : i32, i32
  }
  func.func @transform_3(%arg0: i32) -> (i32, i32) {
    %c0_i32 = arith.constant 0 : i32
    %c0_i32_0 = arith.constant 0 : i32
    %c0_i32_1 = arith.constant 0 : i32
    return %c0_i32, %c0_i32_0 : i32, i32
  }
  func.func @transform_4(%arg0: i32) -> (i32, i32) {
    %c0_i32 = arith.constant 0 : i32
    %c0_i32_0 = arith.constant 0 : i32
    %c0_i32_1 = arith.constant 0 : i32
    return %c0_i32, %c0_i32_0 : i32, i32
  }
  func.func @transform_5(%arg0: i32) -> (i32, i32) {
    %c0_i32 = arith.constant 0 : i32
    %c0_i32_0 = arith.constant 0 : i32
    %c0_i32_1 = arith.constant 0 : i32
    return %c0_i32, %c0_i32_0 : i32, i32
  }
  func.func @transform_6(%arg0: i32) -> (i32, i32) {
    %c0_i32 = arith.constant 0 : i32
    %c0_i32_0 = arith.constant 0 : i32
    %c0_i32_1 = arith.constant 0 : i32
    return %c0_i32, %c0_i32_0 : i32, i32
  }
  func.func @transform_7(%arg0: i32) -> (i32, i32) {
    %c0_i32 = arith.constant 0 : i32
    %c0_i32_0 = arith.constant 0 : i32
    return %arg0, %c0_i32 : i32, i32
  }
}

</mosaic_0001>

<llo_original>
// kernel: discriminator_forward.1
$region0: #{discriminator_forward.1}
  #allocation0 [shape = 'u32[]', space=smem, size = 0x4, offset = 0x4, fixed_abs, tag = 'smem constant byte address 0x4 - core index']
  #allocation1 [shape = 'u32[144,128]{1,0:T(1,128)}', space=vmem, size = 0x12000, scoped, tag = 'internal scratch']
  #allocation2 [shape = 'f32[1,1]{1,0:T(1,128)S(1)}', space=vmem, size = 0x200, scoped, tag = 'scoped memory for discriminator_forward.1']
  %s0 = inlined_call_operand.vmem [shape: f32[8,64], index: 0, kind: input, shape index: {}]
  %s1 = inlined_call_operand.vmem [shape: bf16[64,64], index: 1, kind: input, shape index: {}]
  %s2 = inlined_call_operand.vmem [shape: f32[1,64], index: 2, kind: input, shape index: {}]
  %s3 = inlined_call_operand.vmem [shape: f32[64,16], index: 3, kind: input, shape index: {}]
  %s4 = inlined_call_operand.vmem [shape: f32[1,16], index: 4, kind: input, shape index: {}]
  %s5 = inlined_call_operand.vmem [shape: f32[1,16], index: 5, kind: input, shape index: {}]
  %s6 = inlined_call_operand.<no memory space> [shape: f32[1,1], index: 6, kind: input, shape index: {}]
  %s7 = inlined_call_operand.vmem [shape: f32[8,1], index: 7, kind: output, shape index: {}]
  %s8 = sld [smem:[#allocation0]]
  $region38: #{discriminator_forward.1} parent=0
    _
  %s10 = ssub.s32 1, %s8
  %s11 = scalar_select 0, %s10, %s8
  %v12 = vstv %s6
  %13 = vst [vmem:[#allocation2] sm:$0x1] %v12
  // Predicated region
  $region2: #{discriminator_forward.1} parent=0 // pred_check
    _
  $region3: #{discriminator_forward.1} parent=0 // pred_check_branch
    %15 = sbr.rel (0) target = $region5
  $region4: #{discriminator_forward.1} parent=0 // pred_region
    _
  $region5: #{discriminator_forward.1} parent=0 // pred_fallthru
    _
  // Predicated region
  $region6: #{discriminator_forward.1} parent=0 // pred_check
    _
  $region7: #{discriminator_forward.1} parent=0 // pred_check_branch
    %17 = sbr.rel (0) target = $region9
  $region8: #{discriminator_forward.1} parent=0 // pred_region
    _
  $region9: #{discriminator_forward.1} parent=0 // pred_fallthru
    _
  // Predicated region
  $region10: #{discriminator_forward.1} parent=0 // pred_check
    _
  $region11: #{discriminator_forward.1} parent=0 // pred_check_branch
    %19 = sbr.rel (0) target = $region13
  $region12: #{discriminator_forward.1} parent=0 // pred_region
    _
  $region13: #{discriminator_forward.1} parent=0 // pred_fallthru
    _
  // Predicated region
  $region14: #{discriminator_forward.1} parent=0 // pred_check
    _
  $region15: #{discriminator_forward.1} parent=0 // pred_check_branch
    %21 = sbr.rel (0) target = $region17
  $region16: #{discriminator_forward.1} parent=0 // pred_region
    _
  $region17: #{discriminator_forward.1} parent=0 // pred_fallthru
    _
  // Predicated region
  $region18: #{discriminator_forward.1} parent=0 // pred_check
    _
  $region19: #{discriminator_forward.1} parent=0 // pred_check_branch
    %23 = sbr.rel (0) target = $region21
  $region20: #{discriminator_forward.1} parent=0 // pred_region
    _
  $region21: #{discriminator_forward.1} parent=0 // pred_fallthru
    _
  // Predicated region
  $region22: #{discriminator_forward.1} parent=0 // pred_check
    _
  $region23: #{discriminator_forward.1} parent=0 // pred_check_branch
    %25 = sbr.rel (0) target = $region25
  $region24: #{discriminator_forward.1} parent=0 // pred_region
    _
  $region25: #{discriminator_forward.1} parent=0 // pred_fallthru
    _
  // Predicated region
  $region26: #{discriminator_forward.1} parent=0 // pred_check
    _
  $region27: #{discriminator_forward.1} parent=0 // pred_check_branch
    %27 = sbr.rel (0) target = $region29
  $region28: #{discriminator_forward.1} parent=0 // pred_region
    _
  $region29: #{discriminator_forward.1} parent=0 // pred_fallthru
    _
  %v29 = vld [vmem:[%s0] sm:$0xff]
  %v30 = vpack.c.bf16 %v29, %v29
  %v31 = vld [vmem:[%s1] sm:$0xf]
  %v32 = vld [vmem:[%s1 + $0x4] sm:$0xf]
  %v33 = vld [vmem:[%s1 + $0x8] sm:$0xf]
  %v34 = vld [vmem:[%s1 + $0xc] sm:$0xf]
  %v35 = vld [vmem:[%s1 + $0x10] sm:$0xf]
  %v36 = vld [vmem:[%s1 + $0x14] sm:$0xf]
  %v37 = vld [vmem:[%s1 + $0x18] sm:$0xf]
  %v38 = vld [vmem:[%s1 + $0x1c] sm:$0xf]
  %v39 = vld [vmem:[%s2] sm:$0x1]
  %v41 = vlaneseq
  %v42 = vshrl.u32 %v41, 7
  %v43 = vsub.s32 0, %v42
  %v44 = vrot.slane %v39, %v43
  %v54 = vunpack.c.l.b16 %v31
  %v55 = vunpack.c.l.b16 %v32
  %v56 = vunpack.c.l.b16 %v33
  %v57 = vunpack.c.l.b16 %v34
  %v58 = vunpack.c.l.b16 %v35
  %v59 = vunpack.c.l.b16 %v36
  %v60 = vunpack.c.l.b16 %v37
  %v61 = vunpack.c.l.b16 %v38
  %v62 = vpack.c.b16 %v55, %v54
  %v63 = vpack.c.b16 %v57, %v56
  %v64 = vpack.c.b16 %v59, %v58
  %v65 = vpack.c.b16 %v61, %v60
  %vm70 = vcmask 523264
  %v72 = vsel %vm70, %v30, 0
  %74 = vmatprep.subr.bf16.mxu0 0
  %75 = vmatpush1.bf16.msra.mxu0 0
  %76 = vmatprep.subr.bf16.mxu0 0
  %77 = vmatpush1.bf16.msra.mxu0 0
  %78 = vmatprep.subr.bf16.mxu0 0
  %79 = vmatpush1.bf16.msra.mxu0 0
  %80 = vmatprep.subr.bf16.mxu0 0
  %81 = vmatpush1.bf16.msra.mxu0 0
  %82 = vmatprep.subr.bf16.mxu0 0
  %83 = vmatpush1.bf16.msra.mxu0 %v65
  %84 = vmatprep.subr.bf16.mxu0 0
  %85 = vmatpush1.bf16.msra.mxu0 %v64
  %86 = vmatprep.subr.bf16.mxu0 0
  %87 = vmatpush1.bf16.msra.mxu0 %v63
  %88 = vmatprep.subr.bf16.mxu0 0
  %89 = vmatpush1.bf16.msra.mxu0 %v62
  %90 = vmatprep.subr.bf16.mxu0 0
  %91 = vmatpush2.bf16.msra.mxu0 0
  %92 = vmatprep.subr.bf16.mxu0 0
  %93 = vmatpush2.bf16.msra.mxu0 0
  %94 = vmatprep.subr.bf16.mxu0 0
  %95 = vmatpush2.bf16.msra.mxu0 0
  %96 = vmatprep.subr.bf16.mxu0 0
  %97 = vmatpush2.bf16.msra.mxu0 0
  %98 = vmatprep.subr.bf16.mxu0 0
  %99 = vmatpush2.bf16.msra.mxu0 0
  %100 = vmatprep.subr.bf16.mxu0 0
  %101 = vmatpush2.bf16.msra.mxu0 0
  %102 = vmatprep.subr.bf16.mxu0 0
  %103 = vmatpush2.bf16.msra.mxu0 0
  %104 = vmatprep.subr.bf16.mxu0 0
  %105 = vmatpush2.bf16.msra.mxu0 0
  %106 = vmatprep.mubr.bf16.mxu0 0
  %107 = vmatmul.mubr.bf16.gmra.mxu0 %v72
  %v108 = vpop.f32.mrf.mxu0
  %v109 = vadd.f32 %v44, %v108
  %v110 = vpop.f32.mrf.mxu0
  %v111 = vpop.f32.mrf.mxu0
  %v112 = vpop.f32.mrf.mxu0
  %113 = vdwg.mxu0
  %v114 = vmax.f32 %v109, 0.0
  %v115 = vld [vmem:[%s3] sm:$0xff]
  %v116 = vld [vmem:[%s3 + $0x8] sm:$0xff]
  %v117 = vld [vmem:[%s3 + $0x10] sm:$0xff]
  %v118 = vld [vmem:[%s3 + $0x18] sm:$0xff]
  %v119 = vld [vmem:[%s3 + $0x20] sm:$0xff]
  %v120 = vld [vmem:[%s3 + $0x28] sm:$0xff]
  %v121 = vld [vmem:[%s3 + $0x30] sm:$0xff]
  %v122 = vld [vmem:[%s3 + $0x38] sm:$0xff]
  %v123 = vld [vmem:[%s4] sm:$0x1]
  %v125 = vlaneseq
  %v126 = vshrl.u32 %v125, 7
  %v127 = vsub.s32 0, %v126
  %v128 = vrot.slane %v123, %v127
  %v131 = vsel %vm70, %v114, 0
  %133 = vmatprep.subr.mxu0 0.0
  %134 = vmatpush1.msra.mxu0 0.0
  %135 = vmatprep.subr.mxu0 0.0
  %136 = vmatpush1.msra.mxu0 0.0
  %137 = vmatprep.subr.mxu0 0.0
  %138 = vmatpush1.msra.mxu0 0.0
  %139 = vmatprep.subr.mxu0 0.0
  %140 = vmatpush1.msra.mxu0 0.0
  %141 = vmatprep.subr.mxu0 0.0
  %142 = vmatpush1.msra.mxu0 0.0
  %143 = vmatprep.subr.mxu0 0.0
  %144 = vmatpush1.msra.mxu0 0.0
  %145 = vmatprep.subr.mxu0 0.0
  %146 = vmatpush1.msra.mxu0 0.0
  %147 = vmatprep.subr.mxu0 0.0
  %148 = vmatpush1.msra.mxu0 0.0
  %149 = vmatprep.subr.mxu0 0.0
  %150 = vmatpush1.msra.mxu0 %v122
  %151 = vmatprep.subr.mxu0 0.0
  %152 = vmatpush1.msra.mxu0 %v121
  %153 = vmatprep.subr.mxu0 0.0
  %154 = vmatpush1.msra.mxu0 %v120
  %155 = vmatprep.subr.mxu0 0.0
  %156 = vmatpush1.msra.mxu0 %v119
  %157 = vmatprep.subr.mxu0 0.0
  %158 = vmatpush1.msra.mxu0 %v118
  %159 = vmatprep.subr.mxu0 0.0
  %160 = vmatpush1.msra.mxu0 %v117
  %161 = vmatprep.subr.mxu0 0.0
  %162 = vmatpush1.msra.mxu0 %v116
  %163 = vmatprep.subr.mxu0 0.0
  %164 = vmatpush1.msra.mxu0 %v115
  %165 = vmatprep.subr.mxu0 0.0
  %166 = vmatpush2.msra.mxu0 0.0
  %167 = vmatprep.subr.mxu0 0.0
  %168 = vmatpush2.msra.mxu0 0.0
  %169 = vmatprep.subr.mxu0 0.0
  %170 = vmatpush2.msra.mxu0 0.0
  %171 = vmatprep.subr.mxu0 0.0
  %172 = vmatpush2.msra.mxu0 0.0
  %173 = vmatprep.subr.mxu0 0.0
  %174 = vmatpush2.msra.mxu0 0.0
  %175 = vmatprep.subr.mxu0 0.0
  %176 = vmatpush2.msra.mxu0 0.0
  %177 = vmatprep.subr.mxu0 0.0
  %178 = vmatpush2.msra.mxu0 0.0
  %179 = vmatprep.subr.mxu0 0.0
  %180 = vmatpush2.msra.mxu0 0.0
  %181 = vmatprep.subr.mxu0 0.0
  %182 = vmatpush2.msra.mxu0 0.0
  %183 = vmatprep.subr.mxu0 0.0
  %184 = vmatpush2.msra.mxu0 0.0
  %185 = vmatprep.subr.mxu0 0.0
  %186 = vmatpush2.msra.mxu0 0.0
  %187 = vmatprep.subr.mxu0 0.0
  %188 = vmatpush2.msra.mxu0 0.0
  %189 = vmatprep.subr.mxu0 0.0
  %190 = vmatpush2.msra.mxu0 0.0
  %191 = vmatprep.subr.mxu0 0.0
  %192 = vmatpush2.msra.mxu0 0.0
  %193 = vmatprep.subr.mxu0 0.0
  %194 = vmatpush2.msra.mxu0 0.0
  %195 = vmatprep.subr.mxu0 0.0
  %196 = vmatpush2.msra.mxu0 0.0
  %197 = vmatprep.mubr.f32.mxu0 0.0
  %198 = vmatmul.mubr.f32.gmra.mxu0 %v131
  %v199 = vpop.f32.mrf.mxu0
  %v200 = vadd.f32 %v128, %v199
  %v201 = vpop.f32.mrf.mxu0
  %202 = vdwg.mxu0
  %v203 = vmax.f32 %v200, 0.0
  %v204 = vld [vmem:[%s5] sm:$0x1]
  %v206 = vlaneseq
  %v207 = vshrl.u32 %v206, 7
  %v208 = vsub.s32 0, %v207
  %v209 = vrot.slane %v204, %v208
  %v211 = vmul.f32 %v203, %v209
  %vm212 = vcmask 130048
  %v213 = vsel %vm212, %v211, 0.0
  %214 = vadd.xlane.f32.xlu0 %v213
  %v215 = vpop.xlane.xlu0 %214
  %v216 = vld [vmem:[#allocation2] sm:$0x1]
  %v218 = vlaneseq
  %v219 = vshrl.u32 %v218, 7
  %v220 = vsub.s32 0, %v219
  %v221 = vrot.slane %v216, %v220
  %v223 = vadd.f32 %v215, %v221
  %v224 = vxor.u32 %v223, 2147483648
  %v225 = vmul.f32 %v224, 1.442695
  %v226 = vpow.pop %v225
  %v227 = vadd.f32 %v226, 1.0
  %v228 = vrcp.pop %v227
  %v229 = vmul.f32 1.0, %v228
  %vm230 = vcmask 7168
  %231 = vst.msk [vmem:[%s7] sm:$0xff] %vm230, %v229
  // Predicated region
  $region30: #{discriminator_forward.1} parent=0 // pred_check
    _
  $region31: #{discriminator_forward.1} parent=0 // pred_check_branch
    %233 = sbr.rel (0) target = $region33
  $region32: #{discriminator_forward.1} parent=0 // pred_region
    _
  $region33: #{discriminator_forward.1} parent=0 // pred_fallthru
    _
  // Predicated region
  $region34: #{discriminator_forward.1} parent=0 // pred_check
    _
  $region35: #{discriminator_forward.1} parent=0 // pred_check_branch
    %235 = sbr.rel (0) target = $region37
  $region36: #{discriminator_forward.1} parent=0 // pred_region
    _
  $region37: #{discriminator_forward.1} parent=0 // pred_fallthru
    _

</llo_original>
